<compile_context>
chip_gen: v7x
topology: tpu7x:2x2x1
jax: 0.10.0
libtpu: 0.0.40
codegen_flags: <defaults>
</compile_context>

<pallas_src>
import functools
from math import ceil

import jax
import jax.numpy as jnp
from jax.experimental import pallas as pl
from jax.experimental.pallas import tpu as pltpu


def _count_pad(i, stride, dilation, size):
    return (1 + (i - 1) * stride - i + dilation * (size - 1)) / 2


def _conv_stats_kernel(x_ref, w0_ref, m_ref, y_ref, sum_ref, sq_ref, *,
                       KH, KW, Ho, Wo, Cin, dh, dw):
    """Depthwise conv (packed-lane FMAs) + pointwise conv (block-diag matmul).

    x_ref:   (1, Hp, Wp*Cin)    padded input, one sample, lane-packed NHWC
    w0_ref:  (KH*KW, Wo*Cin)    depthwise weights, pre-tiled along the lane axis
    m_ref:   (Wo*Cin, Wo*Cout)  block-diagonal pointwise weights
    y_ref:   (1, Ho, Wo*Cout)   conv output (lane-dense)
    sum_ref: (1, 1, Wo*Cout)    per-lane sum over the Ho rows of this sample
    sq_ref:  (1, 1, Wo*Cout)    per-lane sum of squares
    """
    x = x_ref[0]          # (Hp, Wp*Cin)
    w0 = w0_ref[...]      # loaded once, outside the tap loop

    acc = jnp.zeros((Ho, Wo * Cin), jnp.float32)
    for kh in range(KH):          # contiguous shifted windows -- no strided slices
        for kw in range(KW):
            win = x[kh * dh: kh * dh + Ho,
                    kw * dw * Cin: kw * dw * Cin + Wo * Cin]
            acc = acc + win * w0[kh * KW + kw]

    # 1x1 conv as a block-diagonal contraction: stays in the packed layout,
    # no reshapes, writes the lane-dense (Ho, Wo*Cout) slab directly.
    y = jnp.dot(acc, m_ref[...], preferred_element_type=jnp.float32)
    y_ref[0] = y

    sum_ref[0] = jnp.sum(y, axis=0, keepdims=True)        # (1, Wo*Cout)
    sq_ref[0] = jnp.sum(y * y, axis=0, keepdims=True)     # (1, Wo*Cout)


def _bn_relu_kernel(y_ref, scale_ref, shift_ref, o_ref):
    """Fused BatchNorm (precomputed per-channel scale/shift) + ReLU, lane-dense."""
    o_ref[0] = jnp.maximum(y_ref[0] * scale_ref[...] + shift_ref[...], 0.0)


def conv0_forward(x_nchw, w0, w1, gamma, beta, *,
                  stride=(1, 1), dilation=(1, 1), eps=1e-5):
    """Conv0 forward: depthwise conv -> pointwise 1x1 conv -> BN(train) -> ReLU.

    x_nchw: (N, Cin, H, W) f32.  w0: (Cin, KH, KW).  w1: (Cout, Cin).
    gamma/beta: (Cout,).  Conv biases are omitted: per-channel constants added
    before training-mode BN are exactly cancelled by the mean subtraction.
    """
    assert stride == (1, 1), "Pallas path implemented for stride=(1,1)"
    # TODO(synk): stride>1 needs an extra subsample pass (accumulate at full
    # resolution, then one strided gather) per the perf-review recipe.

    N, Cin, H, W = x_nchw.shape
    Cout = w1.shape[0]
    KH, KW = w0.shape[1], w0.shape[2]
    dh, dw = dilation

    p0 = ceil(_count_pad(H, stride[0], dh, KH))
    p1 = ceil(_count_pad(W, stride[1], dw, KW))
    Hp, Wp = H + 2 * p0, W + 2 * p1
    Ho = Hp - dh * (KH - 1)
    Wo = Wp - dw * (KW - 1)

    # ---- wrapper-side layout prep (tiny, done once in XLA) ----
    # NCHW -> lane-packed NHWC: (N, Hp, Wp*Cin), channels fastest on the lane.
    x = jnp.transpose(x_nchw.astype(jnp.float32), (0, 2, 3, 1))
    x = jnp.pad(x, ((0, 0), (p0, p0), (p1, p1), (0, 0)))
    x = x.reshape(N, Hp, Wp * Cin)

    # depthwise weights: (KH*KW, Cin), tiled Wo times along the lane axis.
    w0_packed = jnp.tile(w0.astype(jnp.float32).reshape(Cin, KH * KW).T, (1, Wo))
    # pointwise weights as a block-diagonal matrix:
    #   M[j*Cin + c, j*Cout + co] = w1[co, c]
    m = jnp.kron(jnp.eye(Wo, dtype=jnp.float32), w1.astype(jnp.float32).T)

    # ---- pass 1: conv + per-sample sum / sum-of-squares partials ----
    conv_kernel = functools.partial(
        _conv_stats_kernel, KH=KH, KW=KW, Ho=Ho, Wo=Wo, Cin=Cin, dh=dh, dw=dw)
    y_conv, psum, psq = pl.pallas_call(
        conv_kernel,
        grid=(N,),
        in_specs=[
            pl.BlockSpec((1, Hp, Wp * Cin), lambda n: (n, 0, 0)),
            pl.BlockSpec((KH * KW, Wo * Cin), lambda n: (0, 0)),
            pl.BlockSpec((Wo * Cin, Wo * Cout), lambda n: (0, 0)),
        ],
        out_specs=(
            pl.BlockSpec((1, Ho, Wo * Cout), lambda n: (n, 0, 0)),
            pl.BlockSpec((1, 1, Wo * Cout), lambda n: (n, 0, 0)),
            pl.BlockSpec((1, 1, Wo * Cout), lambda n: (n, 0, 0)),
        ),
        out_shape=(
            jax.ShapeDtypeStruct((N, Ho, Wo * Cout), jnp.float32),
            jax.ShapeDtypeStruct((N, 1, Wo * Cout), jnp.float32),
            jax.ShapeDtypeStruct((N, 1, Wo * Cout), jnp.float32),
        ),
        compiler_params=pltpu.CompilerParams(
            dimension_semantics=("parallel",)),
    )(x, w0_packed, m)

    # ---- global BN statistics from the tiny partials (Cout-sized math) ----
    lane_sum = jnp.sum(psum[:, 0, :], axis=0)               # (Wo*Cout,)
    lane_sq = jnp.sum(psq[:, 0, :], axis=0)
    ch_sum = lane_sum.reshape(Wo, Cout).sum(axis=0)          # (Cout,)
    ch_sq = lane_sq.reshape(Wo, Cout).sum(axis=0)
    count = N * Ho * Wo
    mean = ch_sum / count
    var = jnp.maximum(ch_sq / count - mean * mean, 0.0)      # E[y^2] - mean^2
    scale = gamma.astype(jnp.float32) * jax.lax.rsqrt(var + eps)
    shift = beta.astype(jnp.float32) - mean * scale
    scale_packed = jnp.tile(scale, Wo).reshape(1, Wo * Cout)
    shift_packed = jnp.tile(shift, Wo).reshape(1, Wo * Cout)

    # ---- pass 2: y * scale + shift, fused ReLU (lane-dense in and out) ----
    y_out = pl.pallas_call(
        _bn_relu_kernel,
        grid=(N,),
        in_specs=[
            pl.BlockSpec((1, Ho, Wo * Cout), lambda n: (n, 0, 0)),
            pl.BlockSpec((1, Wo * Cout), lambda n: (0, 0)),
            pl.BlockSpec((1, Wo * Cout), lambda n: (0, 0)),
        ],
        out_specs=pl.BlockSpec((1, Ho, Wo * Cout), lambda n: (n, 0, 0)),
        out_shape=jax.ShapeDtypeStruct((N, Ho, Wo * Cout), jnp.float32),
        compiler_params=pltpu.CompilerParams(
            dimension_semantics=("parallel",)),
    )(y_conv, scale_packed, shift_packed)

    # unpack the lane axis and go back to NCHW (cheap XLA reshape/transpose).
    return jnp.transpose(y_out.reshape(N, Ho, Wo, Cout), (0, 3, 1, 2))


def conv0_reference(x_nchw, w0, b0, w1, b1, gamma, beta, *,
                    stride=(1, 1), dilation=(1, 1), eps=1e-5):
    """Pure-JAX reference (lax conv), including the conv biases."""
    N, C, H, W = x_nchw.shape
    Cout = w1.shape[0]
    KH, KW = w0.shape[1], w0.shape[2]
    p0 = ceil(_count_pad(H, stride[0], dilation[0], KH))
    p1 = ceil(_count_pad(W, stride[1], dilation[1], KW))
    x = jnp.pad(x_nchw, ((0, 0), (0, 0), (p0, p0), (p1, p1)))
    dw_w = w0.reshape(C, 1, KH, KW)
    out = jax.lax.conv_general_dilated(
        x, dw_w, window_strides=stride, padding="VALID",
        rhs_dilation=dilation, feature_group_count=C,
        dimension_numbers=("NCHW", "OIHW", "NCHW"))
    out = out + b0.reshape(1, C, 1, 1)
    out = jax.lax.conv_general_dilated(
        out, w1.reshape(Cout, C, 1, 1), window_strides=(1, 1), padding="VALID",
        dimension_numbers=("NCHW", "OIHW", "NCHW"))
    out = out + b1.reshape(1, Cout, 1, 1)
    mean = jnp.mean(out, axis=(0, 2, 3), keepdims=True)
    var = jnp.mean((out - mean) ** 2, axis=(0, 2, 3), keepdims=True)
    out = (out - mean) * jax.lax.rsqrt(var + eps)
    out = out * gamma.reshape(1, Cout, 1, 1) + beta.reshape(1, Cout, 1, 1)
    return jnp.maximum(out, 0.0)


if __name__ == "__main__":
    # Small shapes consistent with the module: N=2, C_in=4, H=W=16, C_out=8, K=3
    N, Cin, H, W = 2, 4, 16, 16
    Cout, K = 8, 3
    stride, dilation = (1, 1), (1, 1)

    key = jax.random.PRNGKey(0)
    kx, kw0, kw1, kb1 = jax.random.split(key, 4)

    x = jax.random.normal(kx, (N, Cin, H, W), jnp.float32)

    # depthwise conv weights: xavier_uniform over (Cin, 1, K, K); bias -> 0
    fan = K * K
    bound = (6.0 / (fan + fan)) ** 0.5
    w0 = jax.random.uniform(kw0, (Cin, K, K), jnp.float32, -bound, bound)
    b0 = jnp.zeros((Cin,), jnp.float32)

    # pointwise 1x1 conv: PyTorch-style uniform init (bias included in reference;
    # the Pallas kernel drops it -- exactly cancelled by training-mode BN)
    pw_bound = 1.0 / (Cin ** 0.5)
    w1 = jax.random.uniform(kw1, (Cout, Cin), jnp.float32, -pw_bound, pw_bound)
    b1 = jax.random.uniform(kb1, (Cout,), jnp.float32, -pw_bound, pw_bound)

    # BatchNorm2d params (default init)
    gamma = jnp.ones((Cout,), jnp.float32)
    beta = jnp.zeros((Cout,), jnp.float32)

    out = conv0_forward(x, w0, w1, gamma, beta, stride=stride, dilation=dilation)
    out = jax.block_until_ready(out)

    ref = conv0_reference(x, w0, b0, w1, b1, gamma, beta,
                          stride=stride, dilation=dilation)
    assert out.shape == ref.shape == (N, Cout, H, W)
    assert jnp.allclose(out, ref, atol=1e-4, rtol=1e-4), \
        float(jnp.max(jnp.abs(out - ref)))

    print("KERNEL_OK")
</pallas_src>

<mosaic_0001>
module attributes {stable_mosaic.version = 11 : i64} {
  func.func @_conv_stats_kernel(%arg0: i32, %arg1: memref<1x18x72xf32, #tpu.memory_space<vmem>>, %arg2: memref<9x64xf32, #tpu.memory_space<vmem>>, %arg3: memref<64x128xf32, #tpu.memory_space<vmem>>, %arg4: memref<1x16x128xf32, #tpu.memory_space<vmem>>, %arg5: memref<1x1x128xf32, #tpu.memory_space<vmem>>, %arg6: memref<1x1x128xf32, #tpu.memory_space<vmem>>) attributes {dimension_semantics = [#tpu.dimension_semantics<parallel>], iteration_bounds = array<i64: 2>, scalar_prefetch = 0 : i64, scratch_operands = 0 : i64, tpu.core_type = #tpu.core_type<tc>, window_params = [{transform_indices = @transform_0, window_bounds = array<i64: 1, 18, 72>}, {pipeline_mode = #tpu.pipeline_mode<synchronous>, transform_indices = @transform_1, window_bounds = array<i64: 9, 64>}, {pipeline_mode = #tpu.pipeline_mode<synchronous>, transform_indices = @transform_2, window_bounds = array<i64: 64, 128>}, {transform_indices = @transform_3, window_bounds = array<i64: 1, 16, 128>}, {transform_indices = @transform_4, window_bounds = array<i64: 1, 1, 128>}, {transform_indices = @transform_5, window_bounds = array<i64: 1, 1, 128>}]} {
    %c0 = arith.constant 0 : index
    %c0_0 = arith.constant 0 : index
    %c0_1 = arith.constant 0 : index
    %0 = vector.load %arg1[%c0, %c0_0, %c0_1] : memref<1x18x72xf32, #tpu.memory_space<vmem>>, vector<1x18x72xf32>
    %1 = vector.shape_cast %0 : vector<1x18x72xf32> to vector<18x72xf32>
    %c0_2 = arith.constant 0 : index
    %c0_3 = arith.constant 0 : index
    %2 = vector.load %arg2[%c0_2, %c0_3] : memref<9x64xf32, #tpu.memory_space<vmem>>, vector<9x64xf32>
    %cst = arith.constant 0.000000e+00 : f32
    %3 = vector.broadcast %cst : f32 to vector<16x64xf32>
    %4 = vector.extract_strided_slice %1 {offsets = [0, 0], sizes = [16, 64], strides = [1, 1]} : vector<18x72xf32> to vector<16x64xf32>
    %5 = vector.extract_strided_slice %2 {offsets = [0, 0], sizes = [1, 64], strides = [1, 1]} : vector<9x64xf32> to vector<1x64xf32>
    %6 = vector.shape_cast %5 : vector<1x64xf32> to vector<64xf32>
    %7 = vector.shape_cast %6 : vector<64xf32> to vector<1x64xf32>
    %8 = vector.broadcast %7 : vector<1x64xf32> to vector<16x64xf32>
    %9 = arith.mulf %4, %8 : vector<16x64xf32>
    %10 = arith.addf %3, %9 : vector<16x64xf32>
    %11 = vector.extract_strided_slice %1 {offsets = [0, 4], sizes = [16, 64], strides = [1, 1]} : vector<18x72xf32> to vector<16x64xf32>
    %12 = vector.extract_strided_slice %2 {offsets = [1, 0], sizes = [1, 64], strides = [1, 1]} : vector<9x64xf32> to vector<1x64xf32>
    %13 = vector.shape_cast %12 : vector<1x64xf32> to vector<64xf32>
    %14 = vector.shape_cast %13 : vector<64xf32> to vector<1x64xf32>
    %15 = vector.broadcast %14 : vector<1x64xf32> to vector<16x64xf32>
    %16 = arith.mulf %11, %15 : vector<16x64xf32>
    %17 = arith.addf %10, %16 : vector<16x64xf32>
    %18 = vector.extract_strided_slice %1 {offsets = [0, 8], sizes = [16, 64], strides = [1, 1]} : vector<18x72xf32> to vector<16x64xf32>
    %19 = vector.extract_strided_slice %2 {offsets = [2, 0], sizes = [1, 64], strides = [1, 1]} : vector<9x64xf32> to vector<1x64xf32>
    %20 = vector.shape_cast %19 : vector<1x64xf32> to vector<64xf32>
    %21 = vector.shape_cast %20 : vector<64xf32> to vector<1x64xf32>
    %22 = vector.broadcast %21 : vector<1x64xf32> to vector<16x64xf32>
    %23 = arith.mulf %18, %22 : vector<16x64xf32>
    %24 = arith.addf %17, %23 : vector<16x64xf32>
    %25 = vector.extract_strided_slice %1 {offsets = [1, 0], sizes = [16, 64], strides = [1, 1]} : vector<18x72xf32> to vector<16x64xf32>
    %26 = vector.extract_strided_slice %2 {offsets = [3, 0], sizes = [1, 64], strides = [1, 1]} : vector<9x64xf32> to vector<1x64xf32>
    %27 = vector.shape_cast %26 : vector<1x64xf32> to vector<64xf32>
    %28 = vector.shape_cast %27 : vector<64xf32> to vector<1x64xf32>
    %29 = vector.broadcast %28 : vector<1x64xf32> to vector<16x64xf32>
    %30 = arith.mulf %25, %29 : vector<16x64xf32>
    %31 = arith.addf %24, %30 : vector<16x64xf32>
    %32 = vector.extract_strided_slice %1 {offsets = [1, 4], sizes = [16, 64], strides = [1, 1]} : vector<18x72xf32> to vector<16x64xf32>
    %33 = vector.extract_strided_slice %2 {offsets = [4, 0], sizes = [1, 64], strides = [1, 1]} : vector<9x64xf32> to vector<1x64xf32>
    %34 = vector.shape_cast %33 : vector<1x64xf32> to vector<64xf32>
    %35 = vector.shape_cast %34 : vector<64xf32> to vector<1x64xf32>
    %36 = vector.broadcast %35 : vector<1x64xf32> to vector<16x64xf32>
    %37 = arith.mulf %32, %36 : vector<16x64xf32>
    %38 = arith.addf %31, %37 : vector<16x64xf32>
    %39 = vector.extract_strided_slice %1 {offsets = [1, 8], sizes = [16, 64], strides = [1, 1]} : vector<18x72xf32> to vector<16x64xf32>
    %40 = vector.extract_strided_slice %2 {offsets = [5, 0], sizes = [1, 64], strides = [1, 1]} : vector<9x64xf32> to vector<1x64xf32>
    %41 = vector.shape_cast %40 : vector<1x64xf32> to vector<64xf32>
    %42 = vector.shape_cast %41 : vector<64xf32> to vector<1x64xf32>
    %43 = vector.broadcast %42 : vector<1x64xf32> to vector<16x64xf32>
    %44 = arith.mulf %39, %43 : vector<16x64xf32>
    %45 = arith.addf %38, %44 : vector<16x64xf32>
    %46 = vector.extract_strided_slice %1 {offsets = [2, 0], sizes = [16, 64], strides = [1, 1]} : vector<18x72xf32> to vector<16x64xf32>
    %47 = vector.extract_strided_slice %2 {offsets = [6, 0], sizes = [1, 64], strides = [1, 1]} : vector<9x64xf32> to vector<1x64xf32>
    %48 = vector.shape_cast %47 : vector<1x64xf32> to vector<64xf32>
    %49 = vector.shape_cast %48 : vector<64xf32> to vector<1x64xf32>
    %50 = vector.broadcast %49 : vector<1x64xf32> to vector<16x64xf32>
    %51 = arith.mulf %46, %50 : vector<16x64xf32>
    %52 = arith.addf %45, %51 : vector<16x64xf32>
    %53 = vector.extract_strided_slice %1 {offsets = [2, 4], sizes = [16, 64], strides = [1, 1]} : vector<18x72xf32> to vector<16x64xf32>
    %54 = vector.extract_strided_slice %2 {offsets = [7, 0], sizes = [1, 64], strides = [1, 1]} : vector<9x64xf32> to vector<1x64xf32>
    %55 = vector.shape_cast %54 : vector<1x64xf32> to vector<64xf32>
    %56 = vector.shape_cast %55 : vector<64xf32> to vector<1x64xf32>
    %57 = vector.broadcast %56 : vector<1x64xf32> to vector<16x64xf32>
    %58 = arith.mulf %53, %57 : vector<16x64xf32>
    %59 = arith.addf %52, %58 : vector<16x64xf32>
    %60 = vector.extract_strided_slice %1 {offsets = [2, 8], sizes = [16, 64], strides = [1, 1]} : vector<18x72xf32> to vector<16x64xf32>
    %61 = vector.extract_strided_slice %2 {offsets = [8, 0], sizes = [1, 64], strides = [1, 1]} : vector<9x64xf32> to vector<1x64xf32>
    %62 = vector.shape_cast %61 : vector<1x64xf32> to vector<64xf32>
    %63 = vector.shape_cast %62 : vector<64xf32> to vector<1x64xf32>
    %64 = vector.broadcast %63 : vector<1x64xf32> to vector<16x64xf32>
    %65 = arith.mulf %60, %64 : vector<16x64xf32>
    %66 = arith.addf %59, %65 : vector<16x64xf32>
    %c0_4 = arith.constant 0 : index
    %c0_5 = arith.constant 0 : index
    %67 = vector.load %arg3[%c0_4, %c0_5] : memref<64x128xf32, #tpu.memory_space<vmem>>, vector<64x128xf32>
    %cst_6 = arith.constant dense<0.000000e+00> : vector<16x128xf32>
    %68 = tpu.matmul %66, %67, %cst_6 {dimension_numbers = #tpu.dot_dimension_numbers<[1], [0], [0], [1], [0, 0, 1, 1], [], []>} : vector<16x64xf32>, vector<64x128xf32>, vector<16x128xf32> -> vector<16x128xf32>
    %c0_7 = arith.constant 0 : index
    %c0_8 = arith.constant 0 : index
    %c0_9 = arith.constant 0 : index
    %69 = vector.load %arg4[%c0_7, %c0_8, %c0_9] : memref<1x16x128xf32, #tpu.memory_space<vmem>>, vector<1x16x128xf32>
    %70 = vector.shape_cast %69 : vector<1x16x128xf32> to vector<16x128xf32>
    %71 = vector.shape_cast %68 : vector<16x128xf32> to vector<1x16x128xf32>
    tpu.vector_store %arg4[%c0_7, %c0_8, %c0_9], %71 {strides = array<i32>} : memref<1x16x128xf32, #tpu.memory_space<vmem>>, vector<1x16x128xf32>,
    %cst_10 = arith.constant dense<0.000000e+00> : vector<128xf32>
    %72 = vector.multi_reduction <add>, %68, %cst_10 [0] : vector<16x128xf32> to vector<128xf32>
    %73 = vector.shape_cast %72 : vector<128xf32> to vector<1x128xf32>
    %c0_11 = arith.constant 0 : index
    %c0_12 = arith.constant 0 : index
    %c0_13 = arith.constant 0 : index
    %74 = vector.load %arg5[%c0_11, %c0_12, %c0_13] : memref<1x1x128xf32, #tpu.memory_space<vmem>>, vector<1x1x128xf32>
    %75 = vector.shape_cast %74 : vector<1x1x128xf32> to vector<1x128xf32>
    %76 = vector.shape_cast %73 : vector<1x128xf32> to vector<1x1x128xf32>
    tpu.vector_store %arg5[%c0_11, %c0_12, %c0_13], %76 {strides = array<i32>} : memref<1x1x128xf32, #tpu.memory_space<vmem>>, vector<1x1x128xf32>,
    %77 = arith.mulf %68, %68 : vector<16x128xf32>
    %cst_14 = arith.constant dense<0.000000e+00> : vector<128xf32>
    %78 = vector.multi_reduction <add>, %77, %cst_14 [0] : vector<16x128xf32> to vector<128xf32>
    %79 = vector.shape_cast %78 : vector<128xf32> to vector<1x128xf32>
    %c0_15 = arith.constant 0 : index
    %c0_16 = arith.constant 0 : index
    %c0_17 = arith.constant 0 : index
    %80 = vector.load %arg6[%c0_15, %c0_16, %c0_17] : memref<1x1x128xf32, #tpu.memory_space<vmem>>, vector<1x1x128xf32>
    %81 = vector.shape_cast %80 : vector<1x1x128xf32> to vector<1x128xf32>
    %82 = vector.shape_cast %79 : vector<1x128xf32> to vector<1x1x128xf32>
    tpu.vector_store %arg6[%c0_15, %c0_16, %c0_17], %82 {strides = array<i32>} : memref<1x1x128xf32, #tpu.memory_space<vmem>>, vector<1x1x128xf32>,
    return
  }
  func.func @transform_0(%arg0: i32) -> (i32, i32, i32) {
    %c0_i32 = arith.constant 0 : i32
    %c0_i32_0 = arith.constant 0 : i32
    %c0_i32_1 = arith.constant 0 : i32
    return %arg0, %c0_i32, %c0_i32_0 : i32, i32, i32
  }
  func.func @transform_1(%arg0: i32) -> (i32, i32) {
    %c0_i32 = arith.constant 0 : i32
    %c0_i32_0 = arith.constant 0 : i32
    %c0_i32_1 = arith.constant 0 : i32
    return %c0_i32, %c0_i32_0 : i32, i32
  }
  func.func @transform_2(%arg0: i32) -> (i32, i32) {
    %c0_i32 = arith.constant 0 : i32
    %c0_i32_0 = arith.constant 0 : i32
    %c0_i32_1 = arith.constant 0 : i32
    return %c0_i32, %c0_i32_0 : i32, i32
  }
  func.func @transform_3(%arg0: i32) -> (i32, i32, i32) {
    %c0_i32 = arith.constant 0 : i32
    %c0_i32_0 = arith.constant 0 : i32
    %c0_i32_1 = arith.constant 0 : i32
    return %arg0, %c0_i32, %c0_i32_0 : i32, i32, i32
  }
  func.func @transform_4(%arg0: i32) -> (i32, i32, i32) {
    %c0_i32 = arith.constant 0 : i32
    %c0_i32_0 = arith.constant 0 : i32
    %c0_i32_1 = arith.constant 0 : i32
    return %arg0, %c0_i32, %c0_i32_0 : i32, i32, i32
  }
  func.func @transform_5(%arg0: i32) -> (i32, i32, i32) {
    %c0_i32 = arith.constant 0 : i32
    %c0_i32_0 = arith.constant 0 : i32
    %c0_i32_1 = arith.constant 0 : i32
    return %arg0, %c0_i32, %c0_i32_0 : i32, i32, i32
  }
}

</mosaic_0001>

<llo_original>
// kernel: tpu_custom_call.1
$region0: #{tpu_custom_call.1}
  #allocation0 [shape = 'u32[]', space=smem, size = 0x4, offset = 0x4, fixed_abs, tag = 'smem constant byte address 0x4 - core index']
  #allocation1 [shape = 'u32[144,128]{1,0:T(1,128)}', space=vmem, size = 0x12000, scoped, tag = 'internal scratch']
  %s0 = inlined_call_operand.vmem [shape: f32[2,18,72], index: 0, kind: input, shape index: {}]
  %s1 = inlined_call_operand.vmem [shape: f32[9,64], index: 1, kind: input, shape index: {}]
  %s2 = inlined_call_operand.vmem [shape: f32[64,128], index: 2, kind: input, shape index: {}]
  %s3 = inlined_call_operand.hbm [shape: f32[2,16,128], index: 3, kind: output, shape index: {0}]
  %s4 = inlined_call_operand.hbm [shape: f32[2,1,128], index: 4, kind: output, shape index: {1}]
  %s5 = inlined_call_operand.hbm [shape: f32[2,1,128], index: 5, kind: output, shape index: {2}]
  %6 = xla_tuple %s3, %s4, %s5
  %s7 = sld [smem:[#allocation0]]
  $region61: #{tpu_custom_call.1} parent=0
    _
  %s9 = ssub.s32 1, %s7
  %s10 = scalar_select 0, %s9, %s7
  $region1: #{tpu_custom_call.1} parent=0
    #allocation2 [shape = 'u8[16384]{0}', space=vmem, size = 0x4000, scoped, tag = 'output window, operand 0']
    #allocation3 [shape = 's32[2]{0}', space=sflag, size = 0x8, scoped, tag = 'scoped memory for tpu_custom_call.1']
    #allocation4 [shape = 'u8[1024]{0}', space=vmem, size = 0x400, scoped, tag = 'output window, operand 1']
    #allocation5 [shape = 's32[2]{0}', space=sflag, size = 0x8, scoped, tag = 'scoped memory for tpu_custom_call.1']
    #allocation6 [shape = 'u8[1024]{0}', space=vmem, size = 0x400, scoped, tag = 'output window, operand 2']
    %11 = vsyncpa [#allocation3], 0
    %s12 = scalar_lea.sflag [#allocation3], 1
    %13 = vsyncpa %s12, 0
    %14 = vsyncpa [#allocation5], 0
    %s15 = scalar_lea.sflag [#allocation5], 1
    %16 = vsyncpa %s15, 0
    loop: start=0, step=1, limit=4
    $region2: #{tpu_custom_call.1} parent=1 // loop_pre_header
      _
    $region3: #{tpu_custom_call.1} parent=1 // loop_header
      %s18 = sphi 0, %s22
      %p19 = scmp.ge.s32.totalorder %s18, 4
      %s28 = sphi 0, %s30
      %s31 = sphi 0, %s28
      %s32 = sphi 0, %s31
      %s48 = sphi 0, %s32
      %s52 = sphi 0, %s52
      %s54 = sphi 0, %s52
      %s55 = sphi 0, %s54
      %s69 = sphi 0, %s55
      %s73 = sphi 0, %s73
      %s75 = sphi 0, %s73
      %s76 = sphi 0, %s75
      %s90 = sphi 0, %s76
      %s96 = sphi 0, %s98
      %s99 = sphi 0, %s96
      %s100 = sphi 0, %s99
      %s116 = sphi 0, %s100
      %s122 = sphi 0, %s124
      %s125 = sphi 0, %s122
      %s126 = sphi 0, %s125
      %s142 = sphi 0, %s126
      %s148 = sphi 0, %s150
      %s151 = sphi 0, %s148
      %s152 = sphi 0, %s151
      %s168 = sphi 0, %s152
    $region4: #{tpu_custom_call.1} parent=1 // loop_header_branch
      %21 = sbr.rel (%p19) target = $region8
    $region5: #{tpu_custom_call.1} parent=1 // loop_body
      %s23 = ssub.s32 %s18, 1
      %s24 = ssub.s32 %s18, 2
      %s25 = sadd.s32 %s18, 1
      %s26 = ssub.s32 %s18, %s25
      %p27 = scmp.eq.s32.totalorder %s26, 0
      %s29 = sadd.s32 %s28, 1
      %s30 = scalar_select %p27, %s28, %s29
      %p33 = pneg %p27
      %p34 = scmp.eq.s32.totalorder %s18, 1
      %p35 = por %p33, %p34
      %p36 = scmp.ne.s32.totalorder %s28, %s31
      %p37 = scmp.eq.s32.totalorder %s18, 0
      %p38 = por %p36, %p37
      %p39 = scmp.ne.s32.totalorder %s28, %s31
      %p40 = scmp.eq.s32.totalorder %s23, 1
      %p41 = por %p39, %p40
      %p42 = scmp.ne.s32.totalorder %s31, %s32
      %p43 = scmp.eq.s32.totalorder %s23, 0
      %p44 = por %p42, %p43
      %p45 = scmp.ne.s32.totalorder %s31, %s32
      %p46 = scmp.eq.s32.totalorder %s24, 1
      %p47 = por %p45, %p46
      %p49 = scmp.ne.s32.totalorder %s32, %s48
      %p50 = scmp.eq.s32.totalorder %s24, 0
      %p51 = por %p49, %p50
      %s53 = sadd.s32 %s52, 1
      %p56 = scmp.eq.s32.totalorder %s18, 1
      %p57 = scmp.ne.s32.totalorder %s52, %s54
      %p58 = scmp.eq.s32.totalorder %s18, 0
      %p59 = por %p57, %p58
      %p60 = scmp.ne.s32.totalorder %s52, %s54
      %p61 = scmp.eq.s32.totalorder %s23, 1
      %p62 = por %p60, %p61
      %p63 = scmp.ne.s32.totalorder %s54, %s55
      %p64 = scmp.eq.s32.totalorder %s23, 0
      %p65 = por %p63, %p64
      %p66 = scmp.ne.s32.totalorder %s54, %s55
      %p67 = scmp.eq.s32.totalorder %s24, 1
      %p68 = por %p66, %p67
      %p70 = scmp.ne.s32.totalorder %s55, %s69
      %p71 = scmp.eq.s32.totalorder %s24, 0
      %p72 = por %p70, %p71
      %s74 = sadd.s32 %s73, 1
      %p77 = scmp.eq.s32.totalorder %s18, 1
      %p78 = scmp.ne.s32.totalorder %s73, %s75
      %p79 = scmp.eq.s32.totalorder %s18, 0
      %p80 = por %p78, %p79
      %p81 = scmp.ne.s32.totalorder %s73, %s75
      %p82 = scmp.eq.s32.totalorder %s23, 1
      %p83 = por %p81, %p82
      %p84 = scmp.ne.s32.totalorder %s75, %s76
      %p85 = scmp.eq.s32.totalorder %s23, 0
      %p86 = por %p84, %p85
      %p87 = scmp.ne.s32.totalorder %s75, %s76
      %p88 = scmp.eq.s32.totalorder %s24, 1
      %p89 = por %p87, %p88
      %p91 = scmp.ne.s32.totalorder %s76, %s90
      %p92 = scmp.eq.s32.totalorder %s24, 0
      %p93 = por %p91, %p92
      %s94 = ssub.s32 %s18, %s25
      %p95 = scmp.eq.s32.totalorder %s94, 0
      %s97 = sadd.s32 %s96, 1
      %s98 = scalar_select %p95, %s96, %s97
      %p101 = pneg %p95
      %p102 = scmp.eq.s32.totalorder %s18, 1
      %p103 = por %p101, %p102
      %p104 = scmp.ne.s32.totalorder %s96, %s99
      %p105 = scmp.eq.s32.totalorder %s18, 0
      %p106 = por %p104, %p105
      %p107 = scmp.ne.s32.totalorder %s96, %s99
      %p108 = scmp.eq.s32.totalorder %s23, 1
      %p109 = por %p107, %p108
      %p110 = scmp.ne.s32.totalorder %s99, %s100
      %p111 = scmp.eq.s32.totalorder %s23, 0
      %p112 = por %p110, %p111
      %p113 = scmp.ne.s32.totalorder %s99, %s100
      %p114 = scmp.eq.s32.totalorder %s24, 1
      %p115 = por %p113, %p114
      %p117 = scmp.ne.s32.totalorder %s100, %s116
      %p118 = scmp.eq.s32.totalorder %s24, 0
      %p119 = por %p117, %p118
      %s120 = ssub.s32 %s18, %s25
      %p121 = scmp.eq.s32.totalorder %s120, 0
      %s123 = sadd.s32 %s122, 1
      %s124 = scalar_select %p121, %s122, %s123
      %p127 = pneg %p121
      %p128 = scmp.eq.s32.totalorder %s18, 1
      %p129 = por %p127, %p128
      %p130 = scmp.ne.s32.totalorder %s122, %s125
      %p131 = scmp.eq.s32.totalorder %s18, 0
      %p132 = por %p130, %p131
      %p133 = scmp.ne.s32.totalorder %s122, %s125
      %p134 = scmp.eq.s32.totalorder %s23, 1
      %p135 = por %p133, %p134
      %p136 = scmp.ne.s32.totalorder %s125, %s126
      %p137 = scmp.eq.s32.totalorder %s23, 0
      %p138 = por %p136, %p137
      %p139 = scmp.ne.s32.totalorder %s125, %s126
      %p140 = scmp.eq.s32.totalorder %s24, 1
      %p141 = por %p139, %p140
      %p143 = scmp.ne.s32.totalorder %s126, %s142
      %p144 = scmp.eq.s32.totalorder %s24, 0
      %p145 = por %p143, %p144
      %s146 = ssub.s32 %s18, %s25
      %p147 = scmp.eq.s32.totalorder %s146, 0
      %s149 = sadd.s32 %s148, 1
      %s150 = scalar_select %p147, %s148, %s149
      %p153 = pneg %p147
      %p154 = scmp.eq.s32.totalorder %s18, 1
      %p155 = por %p153, %p154
      %p156 = scmp.ne.s32.totalorder %s148, %s151
      %p157 = scmp.eq.s32.totalorder %s18, 0
      %p158 = por %p156, %p157
      %p159 = scmp.ne.s32.totalorder %s148, %s151
      %p160 = scmp.eq.s32.totalorder %s23, 1
      %p161 = por %p159, %p160
      %p162 = scmp.ne.s32.totalorder %s151, %s152
      %p163 = scmp.eq.s32.totalorder %s23, 0
      %p164 = por %p162, %p163
      %p165 = scmp.ne.s32.totalorder %s151, %s152
      %p166 = scmp.eq.s32.totalorder %s24, 1
      %p167 = por %p165, %p166
      %p169 = scmp.ne.s32.totalorder %s152, %s168
      %p170 = scmp.eq.s32.totalorder %s24, 0
      %p171 = por %p169, %p170
      %p172 = scmp.le.s32.totalorder 1, %s18
      %p173 = scmp.lt.s32.totalorder %s18, 3
      %p174 = pnand %p172, %p173
      %p175 = pneg %p174
      // Predicated region
      $region9: #{tpu_custom_call.1} parent=5 // pred_check
        _
      $region10: #{tpu_custom_call.1} parent=5 // pred_check_branch
        %177 = sbr.rel (%p174) target = $region12
      $region11: #{tpu_custom_call.1} parent=5 // pred_region
        %s178 = ssub.s32 %s18, 1
        // Predicated region
        $region13: #{tpu_custom_call.1} parent=11 // pred_check
          %p179 = pneg %p65
        $region14: #{tpu_custom_call.1} parent=11 // pred_check_branch
          %181 = sbr.rel (%p179) target = $region16
        $region15: #{tpu_custom_call.1} parent=11 // pred_region
          _
        $region16: #{tpu_custom_call.1} parent=11 // pred_fallthru
          _
        // Predicated region
        $region17: #{tpu_custom_call.1} parent=11 // pred_check
          %p182 = pneg %p86
        $region18: #{tpu_custom_call.1} parent=11 // pred_check_branch
          %184 = sbr.rel (%p182) target = $region20
        $region19: #{tpu_custom_call.1} parent=11 // pred_region
          _
        $region20: #{tpu_custom_call.1} parent=11 // pred_fallthru
          _
      $region12: #{tpu_custom_call.1} parent=5 // pred_fallthru
        _
      %p185 = scmp.lt.s32.totalorder %s18, 2
      // Predicated region
      $region21: #{tpu_custom_call.1} parent=5 // pred_check
        %p186 = pneg %p185
      $region22: #{tpu_custom_call.1} parent=5 // pred_check_branch
        %188 = sbr.rel (%p186) target = $region24
      $region23: #{tpu_custom_call.1} parent=5 // pred_region
        // Predicated region
        $region25: #{tpu_custom_call.1} parent=23 // pred_check
          %p189 = pneg %p38
        $region26: #{tpu_custom_call.1} parent=23 // pred_check_branch
          %191 = sbr.rel (%p189) target = $region28
        $region27: #{tpu_custom_call.1} parent=23 // pred_region
          %p192 = scmp.lt.s32.totalorder %s18, 1
          %s193 = scalar_select %p192, %s18, 1
          %s194 = smul.addr %s193, 3
          %s195 = smul.addr %s194, 8
          %s196 = scalar_lea.vmem %s0, %s195
        $region28: #{tpu_custom_call.1} parent=23 // pred_fallthru
          _
      $region24: #{tpu_custom_call.1} parent=5 // pred_fallthru
        _
      %p197 = scmp.le.s32.totalorder 1, %s18
      %p198 = scmp.lt.s32.totalorder %s18, 3
      %p199 = pnand %p197, %p198
      %p200 = pneg %p199
      // Predicated region
      $region29: #{tpu_custom_call.1} parent=5 // pred_check
        _
      $region30: #{tpu_custom_call.1} parent=5 // pred_check_branch
        %202 = sbr.rel (%p199) target = $region32
      $region31: #{tpu_custom_call.1} parent=5 // pred_region
        %s203 = ssub.s32 %s18, 1
        %p204 = scmp.lt.s32.totalorder %s23, 1
        %s205 = scalar_select %p204, %s23, 1
        %s206 = smul.addr %s205, 3
        %s207 = smul.addr %s206, 8
        %s208 = scalar_lea.vmem %s0, %s207
        %p209 = pneg %p44
        %p210 = pneg %p41
        %p211 = pneg %p65
        %p212 = pneg %p62
        %p213 = pneg %p86
        %p214 = pneg %p83
        %p215 = pneg %p112
        %p216 = pneg %p109
        %s217 = sand.u32 %s99, 1
        %s218 = scalar_lea.sflag [#allocation3], %s217
        %s219 = sand.u32 %s99, 1
        %s220 = smul.addr %s219, 16
        %s221 = scalar_lea.vmem [#allocation2], %s220
        %p222 = pneg %p138
        %p223 = pneg %p135
        %s224 = sand.u32 %s23, 1
        %s225 = scalar_lea.sflag [#allocation5], %s224
        %s226 = sand.u32 %s125, 1
        %s227 = scalar_lea.vmem [#allocation4], %s226
        %p228 = pneg %p164
        %p229 = pneg %p161
        %s230 = sand.u32 %s23, 1
        %s231 = scalar_lea.sflag [#allocation5], %s230
        %s232 = sand.u32 %s151, 1
        %s233 = scalar_lea.vmem [#allocation6], %s232
        %p234 = scmp.lt.s32.totalorder %s23, 1
        %s235 = scalar_select %p234, %s23, 1
        %s236 = smul.addr %s235, 3
        %s237 = smul.addr %s236, 8
        %s238 = scalar_lea.vmem %s0, %s237
        %v239 = vld [vmem:[%s238] sm:$0xff]
        %v240 = vld [vmem:[%s238 + $0x8] sm:$0xff]
        %v241 = vld [vmem:[%s238 + $0x10] sm:$0x3]
        %v242 = vld [vmem:[%s1] sm:$0xff]
        %v243 = vld [vmem:[%s1 + $0x8] sm:$0x1]
        %v244 = vlaneseq
        %v245 = vshrl.u32 %v244, 7
        %v246 = vsub.s32 0, %v245
        %v247 = vrot.slane %v242, %v246
        %v248 = vmul.f32 %v239, %v247
        %v249 = vmul.f32 %v240, %v247
        %v250 = vadd.f32 %v248, 0.0
        %v251 = vadd.f32 %v249, 0.0
        %v252 = vlaneseq
        %v253 = vshrl.u32 %v252, 7
        %v254 = vsub.s32 1, %v253
        %v255 = vrot.slane %v242, %v254
        %257 = vrot.lane.b32.xlu0 %v255, 4
        %v258 = vpop.permute.xlu0 %257
        %v260 = vmul.f32 %v239, %v258
        %v261 = vmul.f32 %v240, %v258
        %264 = vrot.lane.b32.xlu0 %v260, 124
        %v265 = vpop.permute.xlu0 %264
        %266 = vrot.lane.b32.xlu0 %v261, 124
        %v267 = vpop.permute.xlu0 %266
        %v270 = vadd.f32 %v250, %v265
        %v271 = vadd.f32 %v251, %v267
        %v272 = vlaneseq
        %v273 = vshrl.u32 %v272, 7
        %v274 = vsub.s32 2, %v273
        %v275 = vrot.slane %v242, %v274
        %277 = vrot.lane.b32.xlu0 %v275, 8
        %v278 = vpop.permute.xlu0 %277
        %v280 = vmul.f32 %v239, %v278
        %v281 = vmul.f32 %v240, %v278
        %284 = vrot.lane.b32.xlu0 %v280, 120
        %v285 = vpop.permute.xlu0 %284
        %286 = vrot.lane.b32.xlu0 %v281, 120
        %v287 = vpop.permute.xlu0 %286
        %v290 = vadd.f32 %v270, %v285
        %v291 = vadd.f32 %v271, %v287
        %v292 = vlaneseq
        %v293 = vshrl.u32 %v292, 7
        %v294 = vsub.s32 3, %v293
        %v295 = vrot.slane %v242, %v294
        %v296 = vmul.f32 %v239, %v295
        %v297 = vmul.f32 %v240, %v295
        %v298 = vmul.f32 %v241, %v295
        %vm302 = vcmask 1046528
        %v303 = vrot.slane %v296, 1
        %v304 = vrot.slane %v297, 1
        %v305 = vsel %vm302, %v303, %v304
        %v306 = vrot.slane %v298, 1
        %v307 = vsel %vm302, %v304, %v306
        %v310 = vadd.f32 %v290, %v305
        %v311 = vadd.f32 %v291, %v307
        %v312 = vlaneseq
        %v313 = vshrl.u32 %v312, 7
        %v314 = vsub.s32 4, %v313
        %v315 = vrot.slane %v242, %v314
        %317 = vrot.lane.b32.xlu0 %v315, 4
        %v318 = vpop.permute.xlu0 %317
        %v320 = vmul.f32 %v239, %v318
        %v321 = vmul.f32 %v240, %v318
        %v322 = vmul.f32 %v241, %v318
        %v326 = vrot.slane %v320, 1
        %v327 = vrot.slane %v321, 1
        %v328 = vsel %vm302, %v326, %v327
        %v329 = vrot.slane %v322, 1
        %v330 = vsel %vm302, %v327, %v329
        %331 = vrot.lane.b32.xlu0 %v328, 124
        %v332 = vpop.permute.xlu0 %331
        %333 = vrot.lane.b32.xlu0 %v330, 124
        %v334 = vpop.permute.xlu0 %333
        %v337 = vadd.f32 %v310, %v332
        %v338 = vadd.f32 %v311, %v334
        %v339 = vlaneseq
        %v340 = vshrl.u32 %v339, 7
        %v341 = vsub.s32 5, %v340
        %v342 = vrot.slane %v242, %v341
        %344 = vrot.lane.b32.xlu0 %v342, 8
        %v345 = vpop.permute.xlu0 %344
        %v347 = vmul.f32 %v239, %v345
        %v348 = vmul.f32 %v240, %v345
        %v349 = vmul.f32 %v241, %v345
        %v353 = vrot.slane %v347, 1
        %v354 = vrot.slane %v348, 1
        %v355 = vsel %vm302, %v353, %v354
        %v356 = vrot.slane %v349, 1
        %v357 = vsel %vm302, %v354, %v356
        %358 = vrot.lane.b32.xlu0 %v355, 120
        %v359 = vpop.permute.xlu0 %358
        %360 = vrot.lane.b32.xlu0 %v357, 120
        %v361 = vpop.permute.xlu0 %360
        %v364 = vadd.f32 %v337, %v359
        %v365 = vadd.f32 %v338, %v361
        %v366 = vlaneseq
        %v367 = vshrl.u32 %v366, 7
        %v368 = vsub.s32 6, %v367
        %v369 = vrot.slane %v242, %v368
        %v370 = vmul.f32 %v239, %v369
        %v371 = vmul.f32 %v240, %v369
        %v372 = vmul.f32 %v241, %v369
        %vm376 = vcmask 1045504
        %v377 = vrot.slane %v370, 2
        %v378 = vrot.slane %v371, 2
        %v379 = vsel %vm376, %v377, %v378
        %v380 = vrot.slane %v372, 2
        %v381 = vsel %vm376, %v378, %v380
        %v384 = vadd.f32 %v364, %v379
        %v385 = vadd.f32 %v365, %v381
        %v386 = vlaneseq
        %v387 = vshrl.u32 %v386, 7
        %v388 = vsub.s32 7, %v387
        %v389 = vrot.slane %v242, %v388
        %391 = vrot.lane.b32.xlu0 %v389, 4
        %v392 = vpop.permute.xlu0 %391
        %v394 = vmul.f32 %v239, %v392
        %v395 = vmul.f32 %v240, %v392
        %v396 = vmul.f32 %v241, %v392
        %v400 = vrot.slane %v394, 2
        %v401 = vrot.slane %v395, 2
        %v402 = vsel %vm376, %v400, %v401
        %v403 = vrot.slane %v396, 2
        %v404 = vsel %vm376, %v401, %v403
        %405 = vrot.lane.b32.xlu0 %v402, 124
        %v406 = vpop.permute.xlu0 %405
        %407 = vrot.lane.b32.xlu0 %v404, 124
        %v408 = vpop.permute.xlu0 %407
        %v411 = vadd.f32 %v384, %v406
        %v412 = vadd.f32 %v385, %v408
        %v413 = vlaneseq
        %v414 = vshrl.u32 %v413, 7
        %v415 = vsub.s32 0, %v414
        %v416 = vrot.slane %v243, %v415
        %418 = vrot.lane.b32.xlu0 %v416, 8
        %v419 = vpop.permute.xlu0 %418
        %v421 = vmul.f32 %v239, %v419
        %v422 = vmul.f32 %v240, %v419
        %v423 = vmul.f32 %v241, %v419
        %v427 = vrot.slane %v421, 2
        %v428 = vrot.slane %v422, 2
        %v429 = vsel %vm376, %v427, %v428
        %v430 = vrot.slane %v423, 2
        %v431 = vsel %vm376, %v428, %v430
        %432 = vrot.lane.b32.xlu0 %v429, 120
        %v433 = vpop.permute.xlu0 %432
        %434 = vrot.lane.b32.xlu0 %v431, 120
        %v435 = vpop.permute.xlu0 %434
        %v438 = vadd.f32 %v411, %v433
        %v439 = vadd.f32 %v412, %v435
        %v440 = vld [vmem:[%s2] sm:$0xff]
        %v441 = vld [vmem:[%s2 + $0x8] sm:$0xff]
        %v442 = vld [vmem:[%s2 + $0x10] sm:$0xff]
        %v443 = vld [vmem:[%s2 + $0x18] sm:$0xff]
        %v444 = vld [vmem:[%s2 + $0x20] sm:$0xff]
        %v445 = vld [vmem:[%s2 + $0x28] sm:$0xff]
        %v446 = vld [vmem:[%s2 + $0x30] sm:$0xff]
        %v447 = vld [vmem:[%s2 + $0x38] sm:$0xff]
        %vm448 = vcmask 523264
        %v450 = vsel %vm448, %v438, 0
        %v453 = vsel %vm448, %v439, 0
        %455 = vmatprep.subr.mxu0 0.0
        %456 = vmatpush1.msra.mxu0 %v440
        %457 = vmatprep.subr.mxu0 0.0
        %458 = vmatpush1.msra.mxu0 %v441
        %459 = vmatprep.subr.mxu0 0.0
        %460 = vmatpush1.msra.mxu0 %v442
        %461 = vmatprep.subr.mxu0 0.0
        %462 = vmatpush1.msra.mxu0 %v443
        %463 = vmatprep.subr.mxu0 0.0
        %464 = vmatpush1.msra.mxu0 %v444
        %465 = vmatprep.subr.mxu0 0.0
        %466 = vmatpush1.msra.mxu0 %v445
        %467 = vmatprep.subr.mxu0 0.0
        %468 = vmatpush1.msra.mxu0 %v446
        %469 = vmatprep.subr.mxu0 0.0
        %470 = vmatpush1.msra.mxu0 %v447
        %471 = vmatprep.subr.mxu0 0.0
        %472 = vmatpush1.msra.mxu0 0.0
        %473 = vmatprep.subr.mxu0 0.0
        %474 = vmatpush1.msra.mxu0 0.0
        %475 = vmatprep.subr.mxu0 0.0
        %476 = vmatpush1.msra.mxu0 0.0
        %477 = vmatprep.subr.mxu0 0.0
        %478 = vmatpush1.msra.mxu0 0.0
        %479 = vmatprep.subr.mxu0 0.0
        %480 = vmatpush1.msra.mxu0 0.0
        %481 = vmatprep.subr.mxu0 0.0
        %482 = vmatpush1.msra.mxu0 0.0
        %483 = vmatprep.subr.mxu0 0.0
        %484 = vmatpush1.msra.mxu0 0.0
        %485 = vmatprep.subr.mxu0 0.0
        %486 = vmatpush1.msra.mxu0 0.0
        %487 = vmatprep.subr.mxu0 0.0
        %488 = vmatpush1.msra.mxu0 0.0
        %489 = vmatprep.subr.mxu0 0.0
        %490 = vmatpush1.msra.mxu0 0.0
        %491 = vmatprep.subr.mxu0 0.0
        %492 = vmatpush1.msra.mxu0 0.0
        %493 = vmatprep.subr.mxu0 0.0
        %494 = vmatpush1.msra.mxu0 0.0
        %495 = vmatprep.subr.mxu0 0.0
        %496 = vmatpush1.msra.mxu0 0.0
        %497 = vmatprep.subr.mxu0 0.0
        %498 = vmatpush1.msra.mxu0 0.0
        %499 = vmatprep.subr.mxu0 0.0
        %500 = vmatpush1.msra.mxu0 0.0
        %501 = vmatprep.subr.mxu0 0.0
        %502 = vmatpush1.msra.mxu0 0.0
        %503 = vmatprep.subr.mxu0 0.0
        %504 = vmatpush1.msra.mxu0 0.0
        %505 = vmatprep.subr.mxu0 0.0
        %506 = vmatpush1.msra.mxu0 0.0
        %507 = vmatprep.subr.mxu0 0.0
        %508 = vmatpush1.msra.mxu0 0.0
        %509 = vmatprep.subr.mxu0 0.0
        %510 = vmatpush1.msra.mxu0 0.0
        %511 = vmatprep.subr.mxu0 0.0
        %512 = vmatpush1.msra.mxu0 0.0
        %513 = vmatprep.subr.mxu0 0.0
        %514 = vmatpush1.msra.mxu0 0.0
        %515 = vmatprep.subr.mxu0 0.0
        %516 = vmatpush1.msra.mxu0 0.0
        %517 = vmatprep.subr.mxu0 0.0
        %518 = vmatpush1.msra.mxu0 0.0
        %519 = vmatprep.mubr.f32.mxu0 0.0
        %520 = vmatmul.mubr.f32.gmra.mrb[0].mxu0 %v450
        %v521 = vpop.f32.mrb[0].mxu0
        %v522 = vadd.f32 0.0, %v521
        %v523 = vpop.f32.mrb[0].mxu0
        %524 = vmatprep.mubr.f32.mxu0 0.0
        %525 = vmatmul.mubr.f32.gmra.mrb[0].mxu0 %v453
        %v526 = vpop.f32.mrb[0].mxu0
        %v527 = vadd.f32 0.0, %v526
        %v528 = vpop.f32.mrb[0].mxu0
        %529 = vdwg.mxu0
        %530 = vst [vmem:[%s221] sm:$0xff] %v522
        %531 = vst [vmem:[%s221 + $0x8] sm:$0xff] %v527
        %v532 = vadd.f32 %v522, %v527
        %v533 = vrot.slane %v532, 4
        %v534 = vadd.f32 %v532, %v533
        %v535 = vrot.slane %v534, 2
        %v536 = vadd.f32 %v534, %v535
        %v537 = vrot.slane %v536, 1
        %v538 = vadd.f32 %v536, %v537
        %539 = vst [vmem:[%s227] sm:$0x1] %v538
        %v540 = vmul.f32 %v522, %v522
        %v541 = vmul.f32 %v527, %v527
        %v542 = vadd.f32 %v540, %v541
        %v543 = vrot.slane %v542, 4
        %v544 = vadd.f32 %v542, %v543
        %v545 = vrot.slane %v544, 2
        %v546 = vadd.f32 %v544, %v545
        %v547 = vrot.slane %v546, 1
        %v548 = vadd.f32 %v546, %v547
        %549 = vst [vmem:[%s233] sm:$0x1] %v548
        %s550 = sand.u32 %s99, 1
        %s551 = scalar_lea.sflag [#allocation3], %s550
        %s552 = sand.u32 %s99, 1
        %s553 = smul.addr %s552, 16
        %s554 = scalar_lea.vmem [#allocation2], %s553
        %s555 = sand.u32 %s23, 1
        %s556 = scalar_lea.sflag [#allocation5], %s555
        %s557 = sand.u32 %s125, 1
        %s558 = scalar_lea.vmem [#allocation4], %s557
        %s559 = sand.u32 %s23, 1
        %s560 = scalar_lea.sflag [#allocation5], %s559
        %s561 = sand.u32 %s151, 1
        %s562 = scalar_lea.vmem [#allocation6], %s561
        // Predicated region
        $region33: #{tpu_custom_call.1} parent=31 // pred_check
          %p563 = pneg %p109
        $region34: #{tpu_custom_call.1} parent=31 // pred_check_branch
          %565 = sbr.rel (%p563) target = $region36
        $region35: #{tpu_custom_call.1} parent=31 // pred_region
          %s567 = ssub.s32 256, 256
          %568 = vsyncadd %s551, %s567
          %s569 = smul.addr %s23, 2
          %s570 = smul.addr %s569, 128
          %s571 = scalar_lea.hbm %s3, %s570
          %s572 = sshll.u32 %s554, 4
          %s573 = int_to_ptr.vmem [resolvable:$true] %s572
          %578 = dma.vmem_to_hbm [thread:$0]  %s573, 256, %s571, %s551, 128, 128, 8
        $region36: #{tpu_custom_call.1} parent=31 // pred_fallthru
          _
        // Predicated region
        $region37: #{tpu_custom_call.1} parent=31 // pred_check
          %p579 = pneg %p135
        $region38: #{tpu_custom_call.1} parent=31 // pred_check_branch
          %581 = sbr.rel (%p579) target = $region40
        $region39: #{tpu_custom_call.1} parent=31 // pred_region
          %s583 = ssub.s32 16, 16
          %584 = vsyncadd %s556, %s583
          %s585 = smul.addr %s23, 16
          %s586 = scalar_lea.hbm %s4, %s585
          %s588 = sshll.u32 %s558, 4
          %s589 = int_to_ptr.vmem [resolvable:$true] %s588
          %591 = dma.vmem_to_hbm [thread:$0]  %s589, 16, %s586, %s556
        $region40: #{tpu_custom_call.1} parent=31 // pred_fallthru
          _
        // Predicated region
        $region41: #{tpu_custom_call.1} parent=31 // pred_check
          %p592 = pneg %p161
        $region42: #{tpu_custom_call.1} parent=31 // pred_check_branch
          %594 = sbr.rel (%p592) target = $region44
        $region43: #{tpu_custom_call.1} parent=31 // pred_region
          %s596 = ssub.s32 16, 16
          %597 = vsyncadd %s560, %s596
          %s598 = smul.addr %s23, 16
          %s599 = scalar_lea.hbm %s5, %s598
          %s601 = sshll.u32 %s562, 4
          %s602 = int_to_ptr.vmem [resolvable:$true] %s601
          %604 = dma.vmem_to_hbm [thread:$0]  %s602, 16, %s599, %s560
        $region44: #{tpu_custom_call.1} parent=31 // pred_fallthru
          _
      $region32: #{tpu_custom_call.1} parent=5 // pred_fallthru
        _
      %p605 = scmp.le.s32.totalorder 2, %s18
      // Predicated region
      $region45: #{tpu_custom_call.1} parent=5 // pred_check
        %p606 = pneg %p605
      $region46: #{tpu_custom_call.1} parent=5 // pred_check_branch
        %608 = sbr.rel (%p606) target = $region48
      $region47: #{tpu_custom_call.1} parent=5 // pred_region
        %s609 = ssub.s32 %s18, 2
        // Predicated region
        $region49: #{tpu_custom_call.1} parent=47 // pred_check
          %p610 = pneg %p115
        $region50: #{tpu_custom_call.1} parent=47 // pred_check_branch
          %612 = sbr.rel (%p610) target = $region52
        $region51: #{tpu_custom_call.1} parent=47 // pred_region
          %s613 = sand.u32 %s100, 1
          %s614 = scalar_lea.sflag [#allocation3], %s613
          %s615 = sand.u32 %s100, 1
          %s616 = smul.addr %s615, 16
          %s617 = scalar_lea.vmem [#allocation2], %s616
          %618 = dma.done %s614, 256
        $region52: #{tpu_custom_call.1} parent=47 // pred_fallthru
          _
        // Predicated region
        $region53: #{tpu_custom_call.1} parent=47 // pred_check
          %p619 = pneg %p141
        $region54: #{tpu_custom_call.1} parent=47 // pred_check_branch
          %621 = sbr.rel (%p619) target = $region56
        $region55: #{tpu_custom_call.1} parent=47 // pred_region
          %s622 = sand.u32 %s24, 1
          %s623 = scalar_lea.sflag [#allocation5], %s622
          %s624 = sand.u32 %s126, 1
          %s625 = scalar_lea.vmem [#allocation4], %s624
          %626 = dma.done %s623, 16
        $region56: #{tpu_custom_call.1} parent=47 // pred_fallthru
          _
        // Predicated region
        $region57: #{tpu_custom_call.1} parent=47 // pred_check
          %p627 = pneg %p167
        $region58: #{tpu_custom_call.1} parent=47 // pred_check_branch
          %629 = sbr.rel (%p627) target = $region60
        $region59: #{tpu_custom_call.1} parent=47 // pred_region
          %s630 = sand.u32 %s24, 1
          %s631 = scalar_lea.sflag [#allocation5], %s630
          %s632 = sand.u32 %s152, 1
          %s633 = scalar_lea.vmem [#allocation6], %s632
          %634 = dma.done %s631, 16
        $region60: #{tpu_custom_call.1} parent=47 // pred_fallthru
          _
      $region48: #{tpu_custom_call.1} parent=5 // pred_fallthru
        _
    $region6: #{tpu_custom_call.1} parent=1 // loop_footer
      %s22 = sadd.s32 1, %s18
    $region7: #{tpu_custom_call.1} parent=1 // loop_footer_branch
      %17 = sbr.rel target = $region3
    $region8: #{tpu_custom_call.1} parent=1 // loop_exit
      _
    %635 = vsyncpa [#allocation3], 1
    %s636 = scalar_lea.sflag [#allocation3], 1
    %637 = vsyncpa %s636, 1
    %638 = vsyncpa [#allocation5], 1
    %s639 = scalar_lea.sflag [#allocation5], 1
    %640 = vsyncpa %s639, 1

</llo_original>
